<compile_context>
chip_gen: v7x
topology: tpu7x:2x2x1
jax: 0.10.0
libtpu: 0.0.40
codegen_flags: <defaults>
</compile_context>

<pallas_src>
import math
import functools

import jax
import jax.numpy as jnp
from jax import lax
from jax.experimental import pallas as pl
from jax.experimental.pallas import tpu as pltpu


def _choose_tile(n, target):
    """Largest power-of-two tile <= target dividing n (falls back to n)."""
    if n <= target:
        return n
    t = target
    while t >= 8:
        if n % t == 0:
            return t
        t //= 2
    return n


def _qkv_proj_kernel(n_head, x_ref, wqkv_ref, bqkv_ref, qh_ref, kvh_ref):
    """Fused QKV projection for one (batch, row-tile) block.

    x_ref:    (1, Tr, C_in) f32
    wqkv_ref: (C_in, 3C)    f32   (wq pre-scaled by 1/sqrt(D))
    bqkv_ref: (1, 3C)       f32
    qh_ref:   (1, H, Tr, D) bf16
    kvh_ref:  (2, 1, H, Tr, D) f32  (== present; also the attention K/V source)
    """
    x = x_ref[0]
    # Kept f32 so `present` stays at full precision.
    # TODO(synk): bf16 weights here would halve weight DMA/VMEM but loosens `present`.
    qkv = (jnp.dot(x, wqkv_ref[...], preferred_element_type=jnp.float32)
           + bqkv_ref[...])                                  # (Tr, 3C)
    C = qkv.shape[-1] // 3
    D = C // n_head
    q_bf = qkv[:, 0 * C:1 * C].astype(jnp.bfloat16)          # scale already folded in
    k = qkv[:, 1 * C:2 * C]
    v = qkv[:, 2 * C:3 * C]
    # Head split once (static lane slices) -> attention kernel gets head-major blocks.
    for h in range(n_head):
        sl = slice(h * D, (h + 1) * D)
        qh_ref[0, h] = q_bf[:, sl]
        kvh_ref[0, 0, h] = k[:, sl]
        kvh_ref[1, 0, h] = v[:, sl]


def _flash_attn_kernel(causal,
                       q_ref, kv_ref, wp_ref, bp_ref,
                       y_ref,
                       m_sc, l_sc, acc_sc):
    """One (batch, q-tile, kv-tile) flash-attention step + fused output projection.

    q_ref:  (1, H, Tq, D) bf16 ; kv_ref: (2, 1, H, Tk, D) f32
    wp_ref: (H, D, C) bf16     ; bp_ref: (1, C) f32
    y_ref:  (1, Tq, C) f32
    scratch: m,l (H, Tq, 1) f32 ; acc (H, Tq, D) f32
    """
    qi = pl.program_id(1)
    ki = pl.program_id(2)
    nk = pl.num_programs(2)

    @pl.when(ki == 0)
    def _init():
        m_sc[...] = jnp.full(m_sc.shape, -1e30, m_sc.dtype)   # finite: no inf-inf NaN
        l_sc[...] = jnp.zeros(l_sc.shape, l_sc.dtype)
        acc_sc[...] = jnp.zeros(acc_sc.shape, acc_sc.dtype)

    def _step():
        q = q_ref[0]                                     # (H, Tq, D) bf16
        k = kv_ref[0, 0].astype(jnp.bfloat16)            # (H, Tk, D)
        v = kv_ref[1, 0].astype(jnp.bfloat16)            # (H, Tk, D)
        tq = q.shape[1]
        tk = k.shape[1]
        # All heads in one batched MXU dot_general.
        s = jnp.einsum('hqd,hkd->hqk', q, k,
                       preferred_element_type=jnp.float32)    # (H, Tq, Tk)
        if causal:
            # Only the diagonal tile has masked entries (ki < qi tiles are fully
            # below the diagonal; ki > qi tiles are skipped by the pl.when below).
            row = qi * tq + lax.broadcasted_iota(jnp.int32, (tq, tk), 0)
            col = ki * tk + lax.broadcasted_iota(jnp.int32, (tq, tk), 1)
            s = jnp.where((col <= row)[None, :, :], s, -1e30)
        # Online softmax; running stats in f32 (safe on all generations).
        m_prev = m_sc[...]
        m_new = jnp.maximum(m_prev, jnp.max(s, axis=-1, keepdims=True))
        alpha = jnp.exp(m_prev - m_new)
        p = jnp.exp(s - m_new)
        l_sc[...] = alpha * l_sc[...] + jnp.sum(p, axis=-1, keepdims=True)
        acc_sc[...] = alpha * acc_sc[...] + jnp.einsum(
            'hqk,hkd->hqd', p.astype(jnp.bfloat16), v,
            preferred_element_type=jnp.float32)
        m_sc[...] = m_new

    if causal:
        # Skip fully-masked KV tiles (Tq == Tk, aligned) -> ~2x fewer matmuls/exps.
        pl.when(ki <= qi)(_step)
    else:
        _step()

    @pl.when(ki == nk - 1)
    def _finalize():
        # Deferred normalization: scale the (H,Tq,D) output once, not (H,Tq,Tk) probs.
        o = acc_sc[...] * pl.reciprocal(l_sc[...], approx=True)   # (H, Tq, D) f32
        ob = o.astype(jnp.bfloat16)
        w = wp_ref[...]                                           # (H, D, C) bf16
        y = bp_ref[...]                                           # (1, C), broadcasts
        for h in range(ob.shape[0]):
            y = y + jnp.dot(ob[h], w[h], preferred_element_type=jnp.float32)
        y_ref[0] = y.astype(y_ref.dtype)


def causal_self_attention(x, params, n_head, causal=True):
    """x: (B, T, C_in) f32.  Returns (y, present) like the torch module:
    y (B, T, C), present (2, B, n_head, T, head_dim)."""
    B, T, C_in = x.shape
    wq, bq, wk, bk, wv, bv, wp, bp = params
    C = wq.shape[1]
    assert C % n_head == 0
    D = C // n_head
    scale = 1.0 / math.sqrt(D)

    # Fold 1/sqrt(D) into wq/bq; fuse the three projections into one (C_in, 3C) matmul.
    w_qkv = jnp.concatenate([wq * scale, wk, wv], axis=1)
    b_qkv = jnp.concatenate([bq * scale, bk, bv], axis=0).reshape(1, 3 * C)
    wp3 = wp.astype(jnp.bfloat16).reshape(n_head, D, C)       # bf16 output-proj weights
    bp2 = bp.reshape(1, C)

    # ---- Kernel 1: fused QKV projection (row-tiled) --------------------------------
    tr = _choose_tile(T, 256)
    proj_cost = pl.CostEstimate(
        flops=2 * B * T * C_in * 3 * C,
        transcendentals=0,
        bytes_accessed=4 * (x.size + w_qkv.size + b_qkv.size)
        + 2 * B * T * C + 8 * B * T * C)

    q_heads, present = pl.pallas_call(
        functools.partial(_qkv_proj_kernel, n_head),
        out_shape=(
            jax.ShapeDtypeStruct((B, n_head, T, D), jnp.bfloat16),
            jax.ShapeDtypeStruct((2, B, n_head, T, D), jnp.float32),
        ),
        grid_spec=pltpu.PrefetchScalarGridSpec(
            num_scalar_prefetch=0,
            grid=(B, T // tr),
            in_specs=[
                pl.BlockSpec((1, tr, C_in), lambda b, r: (b, r, 0)),
                pl.BlockSpec((C_in, 3 * C), lambda b, r: (0, 0)),
                pl.BlockSpec((1, 3 * C), lambda b, r: (0, 0)),
            ],
            out_specs=[
                pl.BlockSpec((1, n_head, tr, D), lambda b, r: (b, 0, r, 0)),
                pl.BlockSpec((2, 1, n_head, tr, D), lambda b, r: (0, b, 0, r, 0)),
            ],
        ),
        compiler_params=pltpu.CompilerParams(
            dimension_semantics=("parallel", "parallel"),
            vmem_limit_bytes=32 * 1024 * 1024),
        cost_estimate=proj_cost,
    )(x, w_qkv, b_qkv)

    # ---- Kernel 2: flash attention + fused output projection -----------------------
    bt = _choose_tile(T, 128)     # query-tile == kv-tile size
    nt = T // bt

    if causal:
        # Skipped (above-diagonal) KV tiles re-request the previous block -> no DMA.
        kv_index = lambda b, qi, ki: (0, b, 0, jnp.minimum(ki, qi), 0)
    else:
        kv_index = lambda b, qi, ki: (0, b, 0, ki, 0)

    attn_cost = pl.CostEstimate(
        flops=B * (4 * T * T * C + 2 * T * C * C),
        transcendentals=B * n_head * T * T,
        bytes_accessed=(2 * B * T * C + 8 * B * T * C * nt
                        + 2 * C * C + 4 * B * T * C))

    y = pl.pallas_call(
        functools.partial(_flash_attn_kernel, causal),
        out_shape=jax.ShapeDtypeStruct((B, T, C), jnp.float32),
        grid_spec=pltpu.PrefetchScalarGridSpec(
            num_scalar_prefetch=0,
            grid=(B, nt, nt),
            in_specs=[
                pl.BlockSpec((1, n_head, bt, D), lambda b, qi, ki: (b, 0, qi, 0)),
                pl.BlockSpec((2, 1, n_head, bt, D), kv_index),
                pl.BlockSpec((n_head, D, C), lambda b, qi, ki: (0, 0, 0)),
                pl.BlockSpec((1, C), lambda b, qi, ki: (0, 0)),
            ],
            out_specs=pl.BlockSpec((1, bt, C), lambda b, qi, ki: (b, qi, 0)),
            scratch_shapes=[
                pltpu.VMEM((n_head, bt, 1), jnp.float32),   # running max
                pltpu.VMEM((n_head, bt, 1), jnp.float32),   # running sum
                pltpu.VMEM((n_head, bt, D), jnp.float32),   # output accumulator
            ],
        ),
        compiler_params=pltpu.CompilerParams(
            dimension_semantics=("parallel", "parallel", "arbitrary"),
            vmem_limit_bytes=32 * 1024 * 1024),
        cost_estimate=attn_cost,
    )(q_heads, present, wp3, bp2)

    # `present` already has the torch layout: stack((k, v)) with k/v = (B, H, T, D).
    return y, present


def _reference(x, params, n_head, causal=True):
    wq, bq, wk, bk, wv, bv, wp, bp = params
    B, T, _ = x.shape
    C = wq.shape[1]
    D = C // n_head
    hp = jax.lax.Precision.HIGHEST
    q = (jnp.dot(x, wq, precision=hp) + bq).reshape(B, T, n_head, D).transpose(0, 2, 1, 3)
    k = (jnp.dot(x, wk, precision=hp) + bk).reshape(B, T, n_head, D).transpose(0, 2, 1, 3)
    v = (jnp.dot(x, wv, precision=hp) + bv).reshape(B, T, n_head, D).transpose(0, 2, 1, 3)
    att = jnp.einsum('bhtd,bhsd->bhts', q, k, precision=hp) / math.sqrt(D)
    if causal:
        mask = jnp.tril(jnp.ones((T, T), bool))
        att = jnp.where(mask[None, None], att, -jnp.inf)
    att = jax.nn.softmax(att, axis=-1)
    y = jnp.einsum('bhts,bhsd->bhtd', att, v, precision=hp)
    y = y.transpose(0, 2, 1, 3).reshape(B, T, C)
    y = jnp.dot(y, wp, precision=hp) + bp
    return y, jnp.stack((k, v), axis=0)


if __name__ == "__main__":
    # Synthetic config: n_embd=32, n_head=4, block_size >= T, causal=True.
    B, T, C_in, C, H = 2, 8, 32, 32, 4

    key = jax.random.PRNGKey(0)
    keys = jax.random.split(key, 9)
    x = jax.random.normal(keys[0], (B, T, C_in), jnp.float32)

    def linear_params(kw, kb, fan_in, fan_out):
        # PyTorch nn.Linear: weight (out, in); we pre-transpose to (in, out).
        bound = 1.0 / math.sqrt(fan_in)
        w = jax.random.uniform(kw, (fan_in, fan_out), jnp.float32, -bound, bound)
        b = jax.random.uniform(kb, (fan_out,), jnp.float32, -bound, bound)
        return w, b

    wq, bq = linear_params(keys[1], keys[2], C_in, C)
    wk, bk = linear_params(keys[3], keys[4], C_in, C)
    wv, bv = linear_params(keys[5], keys[6], C_in, C)
    wp, bp = linear_params(keys[7], keys[8], C, C)
    params = (wq, bq, wk, bk, wv, bv, wp, bp)

    y, present = causal_self_attention(x, params, n_head=H, causal=True)
    jax.block_until_ready((y, present))

    y_ref, present_ref = _reference(x, params, n_head=H, causal=True)
    # present (k/v projections) stays f32 end-to-end -> tight tolerance.
    assert jnp.allclose(present, present_ref, atol=1e-3, rtol=1e-3), "present mismatch"
    # y goes through bf16 attention/projection matmuls (f32 accumulation) and an
    # approximate softmax reciprocal -> looser tolerance.
    assert jnp.allclose(y, y_ref, atol=2e-2, rtol=2e-2), "output mismatch"

    print("KERNEL_OK")
</pallas_src>

<mosaic_0001>
module attributes {stable_mosaic.version = 11 : i64} {
  func.func @_qkv_proj_kernel(%arg0: i32, %arg1: i32, %arg2: memref<1x8x32xf32, #tpu.memory_space<vmem>>, %arg3: memref<32x96xf32, #tpu.memory_space<vmem>>, %arg4: memref<1x96xf32, #tpu.memory_space<vmem>>, %arg5: memref<1x4x8x8xbf16, #tpu.memory_space<vmem>>, %arg6: memref<2x1x4x8x8xf32, #tpu.memory_space<vmem>>) attributes {dimension_semantics = [#tpu.dimension_semantics<parallel>, #tpu.dimension_semantics<parallel>], iteration_bounds = array<i64: 2, 1>, scalar_prefetch = 0 : i64, scratch_operands = 0 : i64, tpu.core_type = #tpu.core_type<tc>, window_params = [{transform_indices = @transform_0, window_bounds = array<i64: 1, 8, 32>}, {pipeline_mode = #tpu.pipeline_mode<synchronous>, transform_indices = @transform_1, window_bounds = array<i64: 32, 96>}, {pipeline_mode = #tpu.pipeline_mode<synchronous>, transform_indices = @transform_2, window_bounds = array<i64: 1, 96>}, {transform_indices = @transform_3, window_bounds = array<i64: 1, 4, 8, 8>}, {transform_indices = @transform_4, window_bounds = array<i64: 2, 1, 4, 8, 8>}]} {
    %c0 = arith.constant 0 : index
    %c0_0 = arith.constant 0 : index
    %c0_1 = arith.constant 0 : index
    %0 = vector.load %arg2[%c0, %c0_0, %c0_1] : memref<1x8x32xf32, #tpu.memory_space<vmem>>, vector<1x8x32xf32>
    %1 = vector.shape_cast %0 : vector<1x8x32xf32> to vector<8x32xf32>
    %c0_2 = arith.constant 0 : index
    %c0_3 = arith.constant 0 : index
    %2 = vector.load %arg3[%c0_2, %c0_3] : memref<32x96xf32, #tpu.memory_space<vmem>>, vector<32x96xf32>
    %cst = arith.constant dense<0.000000e+00> : vector<8x96xf32>
    %3 = tpu.matmul %1, %2, %cst {dimension_numbers = #tpu.dot_dimension_numbers<[1], [0], [0], [1], [0, 0, 1, 1], [], []>} : vector<8x32xf32>, vector<32x96xf32>, vector<8x96xf32> -> vector<8x96xf32>
    %c0_4 = arith.constant 0 : index
    %c0_5 = arith.constant 0 : index
    %4 = vector.load %arg4[%c0_4, %c0_5] : memref<1x96xf32, #tpu.memory_space<vmem>>, vector<1x96xf32>
    %5 = vector.broadcast %4 : vector<1x96xf32> to vector<8x96xf32>
    %6 = arith.addf %3, %5 : vector<8x96xf32>
    %7 = vector.extract_strided_slice %6 {offsets = [0, 0], sizes = [8, 32], strides = [1, 1]} : vector<8x96xf32> to vector<8x32xf32>
    %8 = arith.truncf %7 : vector<8x32xf32> to vector<8x32xbf16>
    %9 = vector.extract_strided_slice %6 {offsets = [0, 32], sizes = [8, 32], strides = [1, 1]} : vector<8x96xf32> to vector<8x32xf32>
    %10 = vector.extract_strided_slice %6 {offsets = [0, 64], sizes = [8, 32], strides = [1, 1]} : vector<8x96xf32> to vector<8x32xf32>
    %11 = vector.extract_strided_slice %8 {offsets = [0, 0], sizes = [8, 8], strides = [1, 1]} : vector<8x32xbf16> to vector<8x8xbf16>
    %c0_6 = arith.constant 0 : index
    %c0_7 = arith.constant 0 : index
    %c0_8 = arith.constant 0 : index
    %c0_9 = arith.constant 0 : index
    %12 = vector.load %arg5[%c0_6, %c0_7, %c0_8, %c0_9] : memref<1x4x8x8xbf16, #tpu.memory_space<vmem>>, vector<1x1x8x8xbf16>
    %13 = vector.shape_cast %12 : vector<1x1x8x8xbf16> to vector<8x8xbf16>
    %14 = vector.shape_cast %11 : vector<8x8xbf16> to vector<1x1x8x8xbf16>
    tpu.vector_store %arg5[%c0_6, %c0_7, %c0_8, %c0_9], %14 {strides = array<i32>} : memref<1x4x8x8xbf16, #tpu.memory_space<vmem>>, vector<1x1x8x8xbf16>,
    %15 = vector.extract_strided_slice %9 {offsets = [0, 0], sizes = [8, 8], strides = [1, 1]} : vector<8x32xf32> to vector<8x8xf32>
    %c0_10 = arith.constant 0 : index
    %c0_11 = arith.constant 0 : index
    %c0_12 = arith.constant 0 : index
    %c0_13 = arith.constant 0 : index
    %c0_14 = arith.constant 0 : index
    %16 = vector.load %arg6[%c0_10, %c0_11, %c0_12, %c0_13, %c0_14] : memref<2x1x4x8x8xf32, #tpu.memory_space<vmem>>, vector<1x1x1x8x8xf32>
    %17 = vector.shape_cast %16 : vector<1x1x1x8x8xf32> to vector<8x8xf32>
    %18 = vector.shape_cast %15 : vector<8x8xf32> to vector<1x1x1x8x8xf32>
    tpu.vector_store %arg6[%c0_10, %c0_11, %c0_12, %c0_13, %c0_14], %18 {strides = array<i32>} : memref<2x1x4x8x8xf32, #tpu.memory_space<vmem>>, vector<1x1x1x8x8xf32>,
    %19 = vector.extract_strided_slice %10 {offsets = [0, 0], sizes = [8, 8], strides = [1, 1]} : vector<8x32xf32> to vector<8x8xf32>
    %c1 = arith.constant 1 : index
    %c0_15 = arith.constant 0 : index
    %c0_16 = arith.constant 0 : index
    %c0_17 = arith.constant 0 : index
    %c0_18 = arith.constant 0 : index
    %20 = vector.load %arg6[%c1, %c0_15, %c0_16, %c0_17, %c0_18] : memref<2x1x4x8x8xf32, #tpu.memory_space<vmem>>, vector<1x1x1x8x8xf32>
    %21 = vector.shape_cast %20 : vector<1x1x1x8x8xf32> to vector<8x8xf32>
    %22 = vector.shape_cast %19 : vector<8x8xf32> to vector<1x1x1x8x8xf32>
    tpu.vector_store %arg6[%c1, %c0_15, %c0_16, %c0_17, %c0_18], %22 {strides = array<i32>} : memref<2x1x4x8x8xf32, #tpu.memory_space<vmem>>, vector<1x1x1x8x8xf32>,
    %23 = vector.extract_strided_slice %8 {offsets = [0, 8], sizes = [8, 8], strides = [1, 1]} : vector<8x32xbf16> to vector<8x8xbf16>
    %c0_19 = arith.constant 0 : index
    %c1_20 = arith.constant 1 : index
    %c0_21 = arith.constant 0 : index
    %c0_22 = arith.constant 0 : index
    %24 = vector.load %arg5[%c0_19, %c1_20, %c0_21, %c0_22] : memref<1x4x8x8xbf16, #tpu.memory_space<vmem>>, vector<1x1x8x8xbf16>
    %25 = vector.shape_cast %24 : vector<1x1x8x8xbf16> to vector<8x8xbf16>
    %26 = vector.shape_cast %23 : vector<8x8xbf16> to vector<1x1x8x8xbf16>
    tpu.vector_store %arg5[%c0_19, %c1_20, %c0_21, %c0_22], %26 {strides = array<i32>} : memref<1x4x8x8xbf16, #tpu.memory_space<vmem>>, vector<1x1x8x8xbf16>,
    %27 = vector.extract_strided_slice %9 {offsets = [0, 8], sizes = [8, 8], strides = [1, 1]} : vector<8x32xf32> to vector<8x8xf32>
    %c0_23 = arith.constant 0 : index
    %c0_24 = arith.constant 0 : index
    %c1_25 = arith.constant 1 : index
    %c0_26 = arith.constant 0 : index
    %c0_27 = arith.constant 0 : index
    %28 = vector.load %arg6[%c0_23, %c0_24, %c1_25, %c0_26, %c0_27] : memref<2x1x4x8x8xf32, #tpu.memory_space<vmem>>, vector<1x1x1x8x8xf32>
    %29 = vector.shape_cast %28 : vector<1x1x1x8x8xf32> to vector<8x8xf32>
    %30 = vector.shape_cast %27 : vector<8x8xf32> to vector<1x1x1x8x8xf32>
    tpu.vector_store %arg6[%c0_23, %c0_24, %c1_25, %c0_26, %c0_27], %30 {strides = array<i32>} : memref<2x1x4x8x8xf32, #tpu.memory_space<vmem>>, vector<1x1x1x8x8xf32>,
    %31 = vector.extract_strided_slice %10 {offsets = [0, 8], sizes = [8, 8], strides = [1, 1]} : vector<8x32xf32> to vector<8x8xf32>
    %c1_28 = arith.constant 1 : index
    %c0_29 = arith.constant 0 : index
    %c1_30 = arith.constant 1 : index
    %c0_31 = arith.constant 0 : index
    %c0_32 = arith.constant 0 : index
    %32 = vector.load %arg6[%c1_28, %c0_29, %c1_30, %c0_31, %c0_32] : memref<2x1x4x8x8xf32, #tpu.memory_space<vmem>>, vector<1x1x1x8x8xf32>
    %33 = vector.shape_cast %32 : vector<1x1x1x8x8xf32> to vector<8x8xf32>
    %34 = vector.shape_cast %31 : vector<8x8xf32> to vector<1x1x1x8x8xf32>
    tpu.vector_store %arg6[%c1_28, %c0_29, %c1_30, %c0_31, %c0_32], %34 {strides = array<i32>} : memref<2x1x4x8x8xf32, #tpu.memory_space<vmem>>, vector<1x1x1x8x8xf32>,
    %35 = vector.extract_strided_slice %8 {offsets = [0, 16], sizes = [8, 8], strides = [1, 1]} : vector<8x32xbf16> to vector<8x8xbf16>
    %c0_33 = arith.constant 0 : index
    %c2 = arith.constant 2 : index
    %c0_34 = arith.constant 0 : index
    %c0_35 = arith.constant 0 : index
    %36 = vector.load %arg5[%c0_33, %c2, %c0_34, %c0_35] : memref<1x4x8x8xbf16, #tpu.memory_space<vmem>>, vector<1x1x8x8xbf16>
    %37 = vector.shape_cast %36 : vector<1x1x8x8xbf16> to vector<8x8xbf16>
    %38 = vector.shape_cast %35 : vector<8x8xbf16> to vector<1x1x8x8xbf16>
    tpu.vector_store %arg5[%c0_33, %c2, %c0_34, %c0_35], %38 {strides = array<i32>} : memref<1x4x8x8xbf16, #tpu.memory_space<vmem>>, vector<1x1x8x8xbf16>,
    %39 = vector.extract_strided_slice %9 {offsets = [0, 16], sizes = [8, 8], strides = [1, 1]} : vector<8x32xf32> to vector<8x8xf32>
    %c0_36 = arith.constant 0 : index
    %c0_37 = arith.constant 0 : index
    %c2_38 = arith.constant 2 : index
    %c0_39 = arith.constant 0 : index
    %c0_40 = arith.constant 0 : index
    %40 = vector.load %arg6[%c0_36, %c0_37, %c2_38, %c0_39, %c0_40] : memref<2x1x4x8x8xf32, #tpu.memory_space<vmem>>, vector<1x1x1x8x8xf32>
    %41 = vector.shape_cast %40 : vector<1x1x1x8x8xf32> to vector<8x8xf32>
    %42 = vector.shape_cast %39 : vector<8x8xf32> to vector<1x1x1x8x8xf32>
    tpu.vector_store %arg6[%c0_36, %c0_37, %c2_38, %c0_39, %c0_40], %42 {strides = array<i32>} : memref<2x1x4x8x8xf32, #tpu.memory_space<vmem>>, vector<1x1x1x8x8xf32>,
    %43 = vector.extract_strided_slice %10 {offsets = [0, 16], sizes = [8, 8], strides = [1, 1]} : vector<8x32xf32> to vector<8x8xf32>
    %c1_41 = arith.constant 1 : index
    %c0_42 = arith.constant 0 : index
    %c2_43 = arith.constant 2 : index
    %c0_44 = arith.constant 0 : index
    %c0_45 = arith.constant 0 : index
    %44 = vector.load %arg6[%c1_41, %c0_42, %c2_43, %c0_44, %c0_45] : memref<2x1x4x8x8xf32, #tpu.memory_space<vmem>>, vector<1x1x1x8x8xf32>
    %45 = vector.shape_cast %44 : vector<1x1x1x8x8xf32> to vector<8x8xf32>
    %46 = vector.shape_cast %43 : vector<8x8xf32> to vector<1x1x1x8x8xf32>
    tpu.vector_store %arg6[%c1_41, %c0_42, %c2_43, %c0_44, %c0_45], %46 {strides = array<i32>} : memref<2x1x4x8x8xf32, #tpu.memory_space<vmem>>, vector<1x1x1x8x8xf32>,
    %47 = vector.extract_strided_slice %8 {offsets = [0, 24], sizes = [8, 8], strides = [1, 1]} : vector<8x32xbf16> to vector<8x8xbf16>
    %c0_46 = arith.constant 0 : index
    %c3 = arith.constant 3 : index
    %c0_47 = arith.constant 0 : index
    %c0_48 = arith.constant 0 : index
    %48 = vector.load %arg5[%c0_46, %c3, %c0_47, %c0_48] : memref<1x4x8x8xbf16, #tpu.memory_space<vmem>>, vector<1x1x8x8xbf16>
    %49 = vector.shape_cast %48 : vector<1x1x8x8xbf16> to vector<8x8xbf16>
    %50 = vector.shape_cast %47 : vector<8x8xbf16> to vector<1x1x8x8xbf16>
    tpu.vector_store %arg5[%c0_46, %c3, %c0_47, %c0_48], %50 {strides = array<i32>} : memref<1x4x8x8xbf16, #tpu.memory_space<vmem>>, vector<1x1x8x8xbf16>,
    %51 = vector.extract_strided_slice %9 {offsets = [0, 24], sizes = [8, 8], strides = [1, 1]} : vector<8x32xf32> to vector<8x8xf32>
    %c0_49 = arith.constant 0 : index
    %c0_50 = arith.constant 0 : index
    %c3_51 = arith.constant 3 : index
    %c0_52 = arith.constant 0 : index
    %c0_53 = arith.constant 0 : index
    %52 = vector.load %arg6[%c0_49, %c0_50, %c3_51, %c0_52, %c0_53] : memref<2x1x4x8x8xf32, #tpu.memory_space<vmem>>, vector<1x1x1x8x8xf32>
    %53 = vector.shape_cast %52 : vector<1x1x1x8x8xf32> to vector<8x8xf32>
    %54 = vector.shape_cast %51 : vector<8x8xf32> to vector<1x1x1x8x8xf32>
    tpu.vector_store %arg6[%c0_49, %c0_50, %c3_51, %c0_52, %c0_53], %54 {strides = array<i32>} : memref<2x1x4x8x8xf32, #tpu.memory_space<vmem>>, vector<1x1x1x8x8xf32>,
    %55 = vector.extract_strided_slice %10 {offsets = [0, 24], sizes = [8, 8], strides = [1, 1]} : vector<8x32xf32> to vector<8x8xf32>
    %c1_54 = arith.constant 1 : index
    %c0_55 = arith.constant 0 : index
    %c3_56 = arith.constant 3 : index
    %c0_57 = arith.constant 0 : index
    %c0_58 = arith.constant 0 : index
    %56 = vector.load %arg6[%c1_54, %c0_55, %c3_56, %c0_57, %c0_58] : memref<2x1x4x8x8xf32, #tpu.memory_space<vmem>>, vector<1x1x1x8x8xf32>
    %57 = vector.shape_cast %56 : vector<1x1x1x8x8xf32> to vector<8x8xf32>
    %58 = vector.shape_cast %55 : vector<8x8xf32> to vector<1x1x1x8x8xf32>
    tpu.vector_store %arg6[%c1_54, %c0_55, %c3_56, %c0_57, %c0_58], %58 {strides = array<i32>} : memref<2x1x4x8x8xf32, #tpu.memory_space<vmem>>, vector<1x1x1x8x8xf32>,
    return
  }
  func.func @transform_0(%arg0: i32, %arg1: i32) -> (i32, i32, i32) {
    %c0_i32 = arith.constant 0 : i32
    %c0_i32_0 = arith.constant 0 : i32
    return %arg0, %arg1, %c0_i32 : i32, i32, i32
  }
  func.func @transform_1(%arg0: i32, %arg1: i32) -> (i32, i32) {
    %c0_i32 = arith.constant 0 : i32
    %c0_i32_0 = arith.constant 0 : i32
    %c0_i32_1 = arith.constant 0 : i32
    return %c0_i32, %c0_i32_0 : i32, i32
  }
  func.func @transform_2(%arg0: i32, %arg1: i32) -> (i32, i32) {
    %c0_i32 = arith.constant 0 : i32
    %c0_i32_0 = arith.constant 0 : i32
    %c0_i32_1 = arith.constant 0 : i32
    return %c0_i32, %c0_i32_0 : i32, i32
  }
  func.func @transform_3(%arg0: i32, %arg1: i32) -> (i32, i32, i32, i32) {
    %c0_i32 = arith.constant 0 : i32
    %c0_i32_0 = arith.constant 0 : i32
    %c0_i32_1 = arith.constant 0 : i32
    return %arg0, %c0_i32, %arg1, %c0_i32_0 : i32, i32, i32, i32
  }
  func.func @transform_4(%arg0: i32, %arg1: i32) -> (i32, i32, i32, i32, i32) {
    %c0_i32 = arith.constant 0 : i32
    %c0_i32_0 = arith.constant 0 : i32
    %c0_i32_1 = arith.constant 0 : i32
    %c0_i32_2 = arith.constant 0 : i32
    return %c0_i32, %arg0, %c0_i32_0, %arg1, %c0_i32_1 : i32, i32, i32, i32, i32
  }
}

</mosaic_0001>

<llo_original>
// kernel: tpu_custom_call.1
$region0: #{tpu_custom_call.1}
  #allocation0 [shape = 'u32[]', space=smem, size = 0x4, offset = 0x4, fixed_abs, tag = 'smem constant byte address 0x4 - core index']
  #allocation1 [shape = 'u32[144,128]{1,0:T(1,128)}', space=vmem, size = 0x12000, scoped, tag = 'internal scratch']
  #allocation10 [shape = 's32[]', space=sflag, size = 0x4, offset = 0, fixed_abs, tag = 'sflag constant byte address 0x0 - dummy sync flag']
  %s0 = inlined_call_operand.hbm [shape: f32[2,8,32], index: 0, kind: input, shape index: {}]
  %s1 = inlined_call_operand.hbm [shape: f32[32,96], index: 1, kind: input, shape index: {}]
  %s2 = inlined_call_operand.vmem [shape: f32[1,96], index: 2, kind: input, shape index: {}]
  %s3 = inlined_call_operand.hbm [shape: bf16[2,4,8,8], index: 3, kind: output, shape index: {0}]
  %s4 = inlined_call_operand.hbm [shape: f32[2,2,4,8,8], index: 4, kind: output, shape index: {1}]
  %5 = xla_tuple %s3, %s4
  %s6 = sld [smem:[#allocation0]]
  $region61: #{tpu_custom_call.1} parent=0
    _
  %s8 = ssub.s32 1, %s6
  %s9 = scalar_select 0, %s8, %s6
  $region1: #{tpu_custom_call.1} parent=0
    #allocation2 [shape = 'u8[8192]{0}', space=vmem, size = 0x2000, scoped, tag = 'input window, operand 0']
    #allocation3 [shape = 's32[2]{0}', space=sflag, size = 0x8, scoped, tag = 'scoped memory for tpu_custom_call.1']
    #allocation4 [shape = 's32[2]{0}', space=sflag, size = 0x8, scoped, tag = 'scoped memory for tpu_custom_call.1']
    #allocation5 [shape = 'u8[16384]{0}', space=vmem, size = 0x4000, scoped, tag = 'input window, operand 1, single buffered']
    #allocation6 [shape = 's32[1]{0}', space=sflag, size = 0x4, scoped, tag = 'scoped memory for tpu_custom_call.1']
    #allocation7 [shape = 'u8[16384]{0}', space=vmem, size = 0x4000, scoped, tag = 'output window, operand 0']
    #allocation8 [shape = 'u8[65536]{0}', space=vmem, size = 0x10000, scoped, tag = 'output window, operand 1']
    #allocation9 [shape = 's32[2]{0}', space=sflag, size = 0x8, scoped, tag = 'scoped memory for tpu_custom_call.1']
    %10 = vsyncpa [#allocation3], 0
    %s11 = scalar_lea.sflag [#allocation3], 1
    %12 = vsyncpa %s11, 0
    %13 = vsyncpa [#allocation6], 0
    %14 = vsyncpa [#allocation4], 0
    %s15 = scalar_lea.sflag [#allocation4], 1
    %16 = vsyncpa %s15, 0
    %17 = vsyncpa [#allocation9], 0
    %s18 = scalar_lea.sflag [#allocation9], 1
    %19 = vsyncpa %s18, 0
    loop: start=0, step=1, limit=4
    $region2: #{tpu_custom_call.1} parent=1 // loop_pre_header
      _
    $region3: #{tpu_custom_call.1} parent=1 // loop_header
      %s21 = sphi 0, %s25
      %p22 = scmp.ge.s32.totalorder %s21, 4
      %s28 = sphi 0, %s40
      %s29 = sphi 0, %s36
      %s30 = sphi 0, %s28
      %s31 = sphi 0, %s29
      %s32 = sphi 0, %s30
      %s33 = sphi 0, %s31
      %s45 = sphi 0, %s47
      %s48 = sphi 0, %s45
      %s49 = sphi 0, %s48
      %s65 = sphi 0, %s49
      %s69 = sphi 0, %s69
      %s71 = sphi 0, %s69
      %s72 = sphi 0, %s71
      %s86 = sphi 0, %s72
      %s90 = sphi 0, %s90
      %s92 = sphi 0, %s90
      %s93 = sphi 0, %s92
      %s107 = sphi 0, %s93
      %s115 = sphi 0, %s117
      %s118 = sphi 0, %s115
      %s119 = sphi 0, %s118
      %s135 = sphi 0, %s119
      %s143 = sphi 0, %s145
      %s146 = sphi 0, %s143
      %s147 = sphi 0, %s146
      %s163 = sphi 0, %s147
    $region4: #{tpu_custom_call.1} parent=1 // loop_header_branch
      %24 = sbr.rel (%p22) target = $region8
    $region5: #{tpu_custom_call.1} parent=1 // loop_body
      %s26 = ssub.s32 %s21, 1
      %s27 = ssub.s32 %s21, 2
      %s34 = sadd.s32 1, %s29
      %p35 = scmp.ge.s32.totalorder %s34, 1
      %s36 = scalar_select %p35, 0, %s34
      %s37 = sadd.s32 1, %s28
      %s38 = scalar_select %p35, %s37, %s28
      %p39 = scmp.ge.s32.totalorder %s38, 2
      %s40 = scalar_select %p39, 0, %s38
      %s41 = ssub.s32 %s28, %s40
      %s42 = ssub.s32 %s29, %s36
      %s43 = sor.u32 %s41, %s42
      %p44 = scmp.eq.s32.totalorder %s43, 0
      %s46 = sadd.s32 %s45, 1
      %s47 = scalar_select %p44, %s45, %s46
      %p50 = pneg %p44
      %p51 = scmp.eq.s32.totalorder %s21, 1
      %p52 = por %p50, %p51
      %p53 = scmp.ne.s32.totalorder %s45, %s48
      %p54 = scmp.eq.s32.totalorder %s21, 0
      %p55 = por %p53, %p54
      %p56 = scmp.ne.s32.totalorder %s45, %s48
      %p57 = scmp.eq.s32.totalorder %s26, 1
      %p58 = por %p56, %p57
      %p59 = scmp.ne.s32.totalorder %s48, %s49
      %p60 = scmp.eq.s32.totalorder %s26, 0
      %p61 = por %p59, %p60
      %p62 = scmp.ne.s32.totalorder %s48, %s49
      %p63 = scmp.eq.s32.totalorder %s27, 1
      %p64 = por %p62, %p63
      %p66 = scmp.ne.s32.totalorder %s49, %s65
      %p67 = scmp.eq.s32.totalorder %s27, 0
      %p68 = por %p66, %p67
      %s70 = sadd.s32 %s69, 1
      %p73 = scmp.eq.s32.totalorder %s21, 1
      %p74 = scmp.ne.s32.totalorder %s69, %s71
      %p75 = scmp.eq.s32.totalorder %s21, 0
      %p76 = por %p74, %p75
      %p77 = scmp.ne.s32.totalorder %s69, %s71
      %p78 = scmp.eq.s32.totalorder %s26, 1
      %p79 = por %p77, %p78
      %p80 = scmp.ne.s32.totalorder %s71, %s72
      %p81 = scmp.eq.s32.totalorder %s26, 0
      %p82 = por %p80, %p81
      %p83 = scmp.ne.s32.totalorder %s71, %s72
      %p84 = scmp.eq.s32.totalorder %s27, 1
      %p85 = por %p83, %p84
      %p87 = scmp.ne.s32.totalorder %s72, %s86
      %p88 = scmp.eq.s32.totalorder %s27, 0
      %p89 = por %p87, %p88
      %s91 = sadd.s32 %s90, 1
      %p94 = scmp.eq.s32.totalorder %s21, 1
      %p95 = scmp.ne.s32.totalorder %s90, %s92
      %p96 = scmp.eq.s32.totalorder %s21, 0
      %p97 = por %p95, %p96
      %p98 = scmp.ne.s32.totalorder %s90, %s92
      %p99 = scmp.eq.s32.totalorder %s26, 1
      %p100 = por %p98, %p99
      %p101 = scmp.ne.s32.totalorder %s92, %s93
      %p102 = scmp.eq.s32.totalorder %s26, 0
      %p103 = por %p101, %p102
      %p104 = scmp.ne.s32.totalorder %s92, %s93
      %p105 = scmp.eq.s32.totalorder %s27, 1
      %p106 = por %p104, %p105
      %p108 = scmp.ne.s32.totalorder %s93, %s107
      %p109 = scmp.eq.s32.totalorder %s27, 0
      %p110 = por %p108, %p109
      %s111 = ssub.s32 %s28, %s40
      %s112 = ssub.s32 %s29, %s36
      %s113 = sor.u32 %s111, %s112
      %p114 = scmp.eq.s32.totalorder %s113, 0
      %s116 = sadd.s32 %s115, 1
      %s117 = scalar_select %p114, %s115, %s116
      %p120 = pneg %p114
      %p121 = scmp.eq.s32.totalorder %s21, 1
      %p122 = por %p120, %p121
      %p123 = scmp.ne.s32.totalorder %s115, %s118
      %p124 = scmp.eq.s32.totalorder %s21, 0
      %p125 = por %p123, %p124
      %p126 = scmp.ne.s32.totalorder %s115, %s118
      %p127 = scmp.eq.s32.totalorder %s26, 1
      %p128 = por %p126, %p127
      %p129 = scmp.ne.s32.totalorder %s118, %s119
      %p130 = scmp.eq.s32.totalorder %s26, 0
      %p131 = por %p129, %p130
      %p132 = scmp.ne.s32.totalorder %s118, %s119
      %p133 = scmp.eq.s32.totalorder %s27, 1
      %p134 = por %p132, %p133
      %p136 = scmp.ne.s32.totalorder %s119, %s135
      %p137 = scmp.eq.s32.totalorder %s27, 0
      %p138 = por %p136, %p137
      %s139 = ssub.s32 %s28, %s40
      %s140 = ssub.s32 %s29, %s36
      %s141 = sor.u32 %s139, %s140
      %p142 = scmp.eq.s32.totalorder %s141, 0
      %s144 = sadd.s32 %s143, 1
      %s145 = scalar_select %p142, %s143, %s144
      %p148 = pneg %p142
      %p149 = scmp.eq.s32.totalorder %s21, 1
      %p150 = por %p148, %p149
      %p151 = scmp.ne.s32.totalorder %s143, %s146
      %p152 = scmp.eq.s32.totalorder %s21, 0
      %p153 = por %p151, %p152
      %p154 = scmp.ne.s32.totalorder %s143, %s146
      %p155 = scmp.eq.s32.totalorder %s26, 1
      %p156 = por %p154, %p155
      %p157 = scmp.ne.s32.totalorder %s146, %s147
      %p158 = scmp.eq.s32.totalorder %s26, 0
      %p159 = por %p157, %p158
      %p160 = scmp.ne.s32.totalorder %s146, %s147
      %p161 = scmp.eq.s32.totalorder %s27, 1
      %p162 = por %p160, %p161
      %p164 = scmp.ne.s32.totalorder %s147, %s163
      %p165 = scmp.eq.s32.totalorder %s27, 0
      %p166 = por %p164, %p165
      %p167 = scmp.le.s32.totalorder 1, %s21
      %p168 = scmp.lt.s32.totalorder %s21, 3
      %p169 = pnand %p167, %p168
      %p170 = pneg %p169
      // Predicated region
      $region9: #{tpu_custom_call.1} parent=5 // pred_check
        _
      $region10: #{tpu_custom_call.1} parent=5 // pred_check_branch
        %172 = sbr.rel (%p169) target = $region12
      $region11: #{tpu_custom_call.1} parent=5 // pred_region
        %s173 = ssub.s32 %s21, 1
        // Predicated region
        $region13: #{tpu_custom_call.1} parent=11 // pred_check
          %p174 = pneg %p82
        $region14: #{tpu_custom_call.1} parent=11 // pred_check_branch
          %176 = sbr.rel (%p174) target = $region16
        $region15: #{tpu_custom_call.1} parent=11 // pred_region
          %s178 = ssub.s32 512, 512
          %179 = vsyncadd [#allocation6], %s178
          %s180 = sshll.u32 [#allocation5], 4
          %s181 = int_to_ptr.vmem [resolvable:$true] %s180
          %186 = dma.hbm_to_vmem [thread:$0]  %s1, 512, %s181, [#allocation6], 128, 128, 8
        $region16: #{tpu_custom_call.1} parent=11 // pred_fallthru
          _
        // Predicated region
        $region17: #{tpu_custom_call.1} parent=11 // pred_check
          %p187 = pneg %p103
        $region18: #{tpu_custom_call.1} parent=11 // pred_check_branch
          %189 = sbr.rel (%p187) target = $region20
        $region19: #{tpu_custom_call.1} parent=11 // pred_region
          _
        $region20: #{tpu_custom_call.1} parent=11 // pred_fallthru
          _
      $region12: #{tpu_custom_call.1} parent=5 // pred_fallthru
        _
      %p190 = scmp.lt.s32.totalorder %s21, 2
      // Predicated region
      $region21: #{tpu_custom_call.1} parent=5 // pred_check
        %p191 = pneg %p190
      $region22: #{tpu_custom_call.1} parent=5 // pred_check_branch
        %193 = sbr.rel (%p191) target = $region24
      $region23: #{tpu_custom_call.1} parent=5 // pred_region
        // Predicated region
        $region25: #{tpu_custom_call.1} parent=23 // pred_check
          %p194 = pneg %p55
        $region26: #{tpu_custom_call.1} parent=23 // pred_check_branch
          %196 = sbr.rel (%p194) target = $region28
        $region27: #{tpu_custom_call.1} parent=23 // pred_region
          %s197 = sand.u32 %s45, 1
          %s198 = scalar_lea.sflag [#allocation3], %s197
          %s199 = sand.u32 %s45, 1
          %s200 = smul.addr %s199, 8
          %s201 = scalar_lea.vmem [#allocation2], %s200
          %s203 = ssub.s32 128, 128
          %204 = vsyncadd %s198, %s203
          %s205 = sadd.s32 %s29, %s28
          %s206 = smul.addr %s205, 128
          %s207 = scalar_lea.hbm %s0, %s206
          %s209 = sshll.u32 %s201, 4
          %s210 = int_to_ptr.vmem [resolvable:$true] %s209
          %212 = dma.hbm_to_vmem [thread:$0]  %s207, 128, %s210, %s198
        $region28: #{tpu_custom_call.1} parent=23 // pred_fallthru
          _
      $region24: #{tpu_custom_call.1} parent=5 // pred_fallthru
        _
      %p213 = scmp.le.s32.totalorder 1, %s21
      %p214 = scmp.lt.s32.totalorder %s21, 3
      %p215 = pnand %p213, %p214
      %p216 = pneg %p215
      // Predicated region
      $region29: #{tpu_custom_call.1} parent=5 // pred_check
        _
      $region30: #{tpu_custom_call.1} parent=5 // pred_check_branch
        %218 = sbr.rel (%p215) target = $region32
      $region31: #{tpu_custom_call.1} parent=5 // pred_region
        %s219 = ssub.s32 %s21, 1
        %s220 = sand.u32 %s48, 1
        %s221 = scalar_lea.sflag [#allocation3], %s220
        %s222 = sand.u32 %s48, 1
        %s223 = smul.addr %s222, 8
        %s224 = scalar_lea.vmem [#allocation2], %s223
        // Predicated region
        $region33: #{tpu_custom_call.1} parent=31 // pred_check
          %p225 = pneg %p61
        $region34: #{tpu_custom_call.1} parent=31 // pred_check_branch
          %227 = sbr.rel (%p225) target = $region36
        $region35: #{tpu_custom_call.1} parent=31 // pred_region
          %228 = dma.done %s221, 128
        $region36: #{tpu_custom_call.1} parent=31 // pred_fallthru
          _
        // Predicated region
        $region37: #{tpu_custom_call.1} parent=31 // pred_check
          %p229 = pneg %p82
        $region38: #{tpu_custom_call.1} parent=31 // pred_check_branch
          %231 = sbr.rel (%p229) target = $region40
        $region39: #{tpu_custom_call.1} parent=31 // pred_region
          %232 = dma.done [#allocation6], 512
        $region40: #{tpu_custom_call.1} parent=31 // pred_fallthru
          _
        %s233 = sand.u32 %s48, 1
        %s234 = scalar_lea.sflag [#allocation3], %s233
        %s235 = sand.u32 %s48, 1
        %s236 = smul.addr %s235, 8
        %s237 = scalar_lea.vmem [#allocation2], %s236
        %p238 = pneg %p61
        %p239 = pneg %p58
        %p240 = pneg %p82
        %p241 = pneg %p79
        %p242 = pneg %p103
        %p243 = pneg %p100
        %p244 = pneg %p131
        %p245 = pneg %p128
        %s246 = sand.u32 %s118, 1
        %s247 = scalar_lea.sflag [#allocation4], %s246
        %s248 = sand.u32 %s118, 1
        %s249 = smul.addr %s248, 16
        %s250 = scalar_lea.vmem [#allocation7], %s249
        %p251 = pneg %p159
        %p252 = pneg %p156
        %s253 = sand.u32 %s146, 1
        %s254 = scalar_lea.sflag [#allocation9], %s253
        %s255 = sand.u32 %s146, 1
        %s256 = smul.addr %s255, 64
        %s257 = scalar_lea.vmem [#allocation8], %s256
        %v258 = vld [vmem:[%s224] sm:$0xff]
        %v259 = vld [vmem:[#allocation5] sm:$0xff]
        %v260 = vld [vmem:[#allocation5 + $0x8] sm:$0xff]
        %v261 = vld [vmem:[#allocation5 + $0x10] sm:$0xff]
        %v262 = vld [vmem:[#allocation5 + $0x18] sm:$0xff]
        %v263 = vld [vmem:[%s2] sm:$0x1]
        %v265 = vlaneseq
        %v266 = vshrl.u32 %v265, 7
        %v267 = vsub.s32 0, %v266
        %v268 = vrot.slane %v263, %v267
        %vm270 = vcmask 261120
        %v272 = vsel %vm270, %v258, 0
        %274 = vmatprep.subr.mxu0 0.0
        %275 = vmatpush1.msra.mxu0 %v259
        %276 = vmatprep.subr.mxu0 0.0
        %277 = vmatpush1.msra.mxu0 %v260
        %278 = vmatprep.subr.mxu0 0.0
        %279 = vmatpush1.msra.mxu0 %v261
        %280 = vmatprep.subr.mxu0 0.0
        %281 = vmatpush1.msra.mxu0 %v262
        %282 = vmatprep.subr.mxu0 0.0
        %283 = vmatpush1.msra.mxu0 0.0
        %284 = vmatprep.subr.mxu0 0.0
        %285 = vmatpush1.msra.mxu0 0.0
        %286 = vmatprep.subr.mxu0 0.0
        %287 = vmatpush1.msra.mxu0 0.0
        %288 = vmatprep.subr.mxu0 0.0
        %289 = vmatpush1.msra.mxu0 0.0
        %290 = vmatprep.subr.mxu0 0.0
        %291 = vmatpush1.msra.mxu0 0.0
        %292 = vmatprep.subr.mxu0 0.0
        %293 = vmatpush1.msra.mxu0 0.0
        %294 = vmatprep.subr.mxu0 0.0
        %295 = vmatpush1.msra.mxu0 0.0
        %296 = vmatprep.subr.mxu0 0.0
        %297 = vmatpush1.msra.mxu0 0.0
        %298 = vmatprep.subr.mxu0 0.0
        %299 = vmatpush1.msra.mxu0 0.0
        %300 = vmatprep.subr.mxu0 0.0
        %301 = vmatpush1.msra.mxu0 0.0
        %302 = vmatprep.subr.mxu0 0.0
        %303 = vmatpush1.msra.mxu0 0.0
        %304 = vmatprep.subr.mxu0 0.0
        %305 = vmatpush1.msra.mxu0 0.0
        %306 = vmatprep.subr.mxu0 0.0
        %307 = vmatpush1.msra.mxu0 0.0
        %308 = vmatprep.subr.mxu0 0.0
        %309 = vmatpush1.msra.mxu0 0.0
        %310 = vmatprep.subr.mxu0 0.0
        %311 = vmatpush1.msra.mxu0 0.0
        %312 = vmatprep.subr.mxu0 0.0
        %313 = vmatpush1.msra.mxu0 0.0
        %314 = vmatprep.subr.mxu0 0.0
        %315 = vmatpush1.msra.mxu0 0.0
        %316 = vmatprep.subr.mxu0 0.0
        %317 = vmatpush1.msra.mxu0 0.0
        %318 = vmatprep.subr.mxu0 0.0
        %319 = vmatpush1.msra.mxu0 0.0
        %320 = vmatprep.subr.mxu0 0.0
        %321 = vmatpush1.msra.mxu0 0.0
        %322 = vmatprep.subr.mxu0 0.0
        %323 = vmatpush1.msra.mxu0 0.0
        %324 = vmatprep.subr.mxu0 0.0
        %325 = vmatpush1.msra.mxu0 0.0
        %326 = vmatprep.subr.mxu0 0.0
        %327 = vmatpush1.msra.mxu0 0.0
        %328 = vmatprep.subr.mxu0 0.0
        %329 = vmatpush1.msra.mxu0 0.0
        %330 = vmatprep.subr.mxu0 0.0
        %331 = vmatpush1.msra.mxu0 0.0
        %332 = vmatprep.subr.mxu0 0.0
        %333 = vmatpush1.msra.mxu0 0.0
        %334 = vmatprep.subr.mxu0 0.0
        %335 = vmatpush1.msra.mxu0 0.0
        %336 = vmatprep.subr.mxu0 0.0
        %337 = vmatpush1.msra.mxu0 0.0
        %338 = vmatprep.mubr.f32.mxu0 0.0
        %339 = vmatmul.mubr.f32.gmra.mrb[0].mxu0 %v272
        %v340 = vpop.f32.mrb[0].mxu0
        %v341 = vadd.f32 %v268, %v340
        %v342 = vpop.f32.mrb[0].mxu0
        %343 = vdwg.mxu0
        %v344 = vpack.c.bf16 %v341, %v341
        %vm345 = vcmask 60416
        %346 = vst.msk [vmem:[%s250] sm:$0xf] %vm345, %v344
        %348 = vrot.lane.b32.xlu0 %v341, 96
        %v349 = vpop.permute.xlu0 %348
        %vm351 = vcmask 64512
        %352 = vst.msk [vmem:[%s257] sm:$0xff] %vm351, %v349
        %353 = vrot.lane.b32.xlu0 %v341, 64
        %v354 = vpop.permute.xlu0 %353
        %s356 = scalar_lea.vmem %s257, 32 [#allocation8]
        %357 = vst.msk [vmem:[%s356] sm:$0xff] %vm351, %v354
        %v359 = vunpack.c.l.b16 %v344
        %v360 = vpack.c.b16 %v359, %v359
        %361 = vrot.lane.b32.xlu0 %v360, 120
        %v362 = vpop.permute.xlu0 %361
        %s364 = scalar_lea.vmem %s250, 4 [#allocation7]
        %365 = vst.msk [vmem:[%s364] sm:$0xf] %vm345, %v362
        %366 = vrot.lane.b32.xlu0 %v341, 88
        %v367 = vpop.permute.xlu0 %366
        %s369 = scalar_lea.vmem %s257, 8 [#allocation8]
        %370 = vst.msk [vmem:[%s369] sm:$0xff] %vm351, %v367
        %371 = vrot.lane.b32.xlu0 %v341, 56
        %v372 = vpop.permute.xlu0 %371
        %s374 = scalar_lea.vmem %s257, 40 [#allocation8]
        %375 = vst.msk [vmem:[%s374] sm:$0xff] %vm351, %v372
        %376 = vrot.lane.b32.xlu0 %v360, 112
        %v377 = vpop.permute.xlu0 %376
        %s379 = scalar_lea.vmem %s250, 8 [#allocation7]
        %380 = vst.msk [vmem:[%s379] sm:$0xf] %vm345, %v377
        %381 = vrot.lane.b32.xlu0 %v341, 80
        %v382 = vpop.permute.xlu0 %381
        %s384 = scalar_lea.vmem %s257, 16 [#allocation8]
        %385 = vst.msk [vmem:[%s384] sm:$0xff] %vm351, %v382
        %386 = vrot.lane.b32.xlu0 %v341, 48
        %v387 = vpop.permute.xlu0 %386
        %s389 = scalar_lea.vmem %s257, 48 [#allocation8]
        %390 = vst.msk [vmem:[%s389] sm:$0xff] %vm351, %v387
        %391 = vrot.lane.b32.xlu0 %v360, 104
        %v392 = vpop.permute.xlu0 %391
        %s394 = scalar_lea.vmem %s250, 12 [#allocation7]
        %395 = vst.msk [vmem:[%s394] sm:$0xf] %vm345, %v392
        %396 = vrot.lane.b32.xlu0 %v341, 72
        %v397 = vpop.permute.xlu0 %396
        %s399 = scalar_lea.vmem %s257, 24 [#allocation8]
        %400 = vst.msk [vmem:[%s399] sm:$0xff] %vm351, %v397
        %401 = vrot.lane.b32.xlu0 %v341, 40
        %v402 = vpop.permute.xlu0 %401
        %s404 = scalar_lea.vmem %s257, 56 [#allocation8]
        %405 = vst.msk [vmem:[%s404] sm:$0xff] %vm351, %v402
        %s406 = sand.u32 %s118, 1
        %s407 = scalar_lea.sflag [#allocation4], %s406
        %s408 = sand.u32 %s118, 1
        %s409 = smul.addr %s408, 16
        %s410 = scalar_lea.vmem [#allocation7], %s409
        %s411 = sand.u32 %s146, 1
        %s412 = scalar_lea.sflag [#allocation9], %s411
        %s413 = sand.u32 %s146, 1
        %s414 = smul.addr %s413, 64
        %s415 = scalar_lea.vmem [#allocation8], %s414
        // Predicated region
        $region41: #{tpu_custom_call.1} parent=31 // pred_check
          %p416 = pneg %p128
        $region42: #{tpu_custom_call.1} parent=31 // pred_check_branch
          %418 = sbr.rel (%p416) target = $region44
        $region43: #{tpu_custom_call.1} parent=31 // pred_region
          %s420 = ssub.s32 256, 256
          %421 = vsyncadd %s407, %s420
          %s422 = smul.addr %s30, 4
          %s423 = sadd.s32 %s31, %s422
          %s424 = smul.addr %s423, 64
          %s425 = scalar_lea.hbm %s3, %s424
          %s426 = sshll.u32 %s410, 4
          %s427 = int_to_ptr.vmem [resolvable:$true] %s426
          %432 = dma.vmem_to_hbm [thread:$0]  %s427, 256, %s425, %s407, 64, 64, 4
        $region44: #{tpu_custom_call.1} parent=31 // pred_fallthru
          _
        // Predicated region
        $region45: #{tpu_custom_call.1} parent=31 // pred_check
          %p433 = pneg %p156
        $region46: #{tpu_custom_call.1} parent=31 // pred_check_branch
          %435 = sbr.rel (%p433) target = $region48
        $region47: #{tpu_custom_call.1} parent=31 // pred_region
          #allocation11 [shape = 'u32[6]{0}', space=smem, size = 0x18, scoped, tag = 'DMA stride descriptor']
          %s437 = ssub.s32 1024, 1024
          %438 = vsyncadd %s412, %s437
          %s439 = smul.addr %s30, 4
          %s440 = sadd.s32 %s31, %s439
          %s441 = smul.addr %s440, 128
          %s442 = scalar_lea.hbm %s4, %s441
          %s444 = sshll.u32 1, 14
          %s445 = sxor.u32 4294967295, %s444
          %s448 = sshll.u32 7, 18
          %s449 = sxor.u32 4294967295, %s448
          %s450 = sand.u32 0, %s449
          %s452 = sor.u32 %s450, 0
          %s454 = sshll.u32 3, 24
          %s455 = sxor.u32 4294967295, %s454
          %s456 = sand.u32 %s452, %s455
          %s458 = sor.u32 %s456, 0
          %s459 = sshll.u32 %s415, 4
          %s460 = int_to_ptr.vmem [resolvable:$true] %s459
          %466 = sst [smem:[#allocation11]] 512
          %s467 = scalar_lea.smem [#allocation11], 1
          %468 = sst [smem:[%s467]] 1024
          %s469 = scalar_lea.smem [#allocation11], 2
          %470 = sst [smem:[%s469]] 4
          %s471 = scalar_lea.smem [#allocation11], 3
          %472 = sst [smem:[%s471]] 128
          %s473 = scalar_lea.smem [#allocation11], 4
          %474 = sst [smem:[%s473]] 128
          %s475 = scalar_lea.smem [#allocation11], 5
          %476 = sst [smem:[%s475]] 8
          %478 = dma.general %s460, 1024, %s442, %s412, [#allocation10], [#allocation11], %s458, 0
        $region48: #{tpu_custom_call.1} parent=31 // pred_fallthru
          _
      $region32: #{tpu_custom_call.1} parent=5 // pred_fallthru
        _
      %p479 = scmp.le.s32.totalorder 2, %s21
      // Predicated region
      $region49: #{tpu_custom_call.1} parent=5 // pred_check
        %p480 = pneg %p479
      $region50: #{tpu_custom_call.1} parent=5 // pred_check_branch
        %482 = sbr.rel (%p480) target = $region52
      $region51: #{tpu_custom_call.1} parent=5 // pred_region
        %s483 = ssub.s32 %s21, 2
        // Predicated region
        $region53: #{tpu_custom_call.1} parent=51 // pred_check
          %p484 = pneg %p134
        $region54: #{tpu_custom_call.1} parent=51 // pred_check_branch
          %486 = sbr.rel (%p484) target = $region56
        $region55: #{tpu_custom_call.1} parent=51 // pred_region
          %s487 = sand.u32 %s119, 1
          %s488 = scalar_lea.sflag [#allocation4], %s487
          %s489 = sand.u32 %s119, 1
          %s490 = smul.addr %s489, 16
          %s491 = scalar_lea.vmem [#allocation7], %s490
          %492 = dma.done %s488, 256
        $region56: #{tpu_custom_call.1} parent=51 // pred_fallthru
          _
        // Predicated region
        $region57: #{tpu_custom_call.1} parent=51 // pred_check
          %p493 = pneg %p162
        $region58: #{tpu_custom_call.1} parent=51 // pred_check_branch
          %495 = sbr.rel (%p493) target = $region60
        $region59: #{tpu_custom_call.1} parent=51 // pred_region
          %s496 = sand.u32 %s147, 1
          %s497 = scalar_lea.sflag [#allocation9], %s496
          %s498 = sand.u32 %s147, 1
          %s499 = smul.addr %s498, 64
          %s500 = scalar_lea.vmem [#allocation8], %s499
          %501 = dma.done %s497, 1024
        $region60: #{tpu_custom_call.1} parent=51 // pred_fallthru
          _
      $region52: #{tpu_custom_call.1} parent=5 // pred_fallthru
        _
    $region6: #{tpu_custom_call.1} parent=1 // loop_footer
      %s25 = sadd.s32 1, %s21
    $region7: #{tpu_custom_call.1} parent=1 // loop_footer_branch
      %20 = sbr.rel target = $region3
    $region8: #{tpu_custom_call.1} parent=1 // loop_exit
      _
    %502 = vsyncpa [#allocation3], 1
    %s503 = scalar_lea.sflag [#allocation3], 1
    %504 = vsyncpa %s503, 1
    %505 = vsyncpa [#allocation6], 1
    %506 = vsyncpa [#allocation4], 1
    %s507 = scalar_lea.sflag [#allocation4], 1
    %508 = vsyncpa %s507, 1
    %509 = vsyncpa [#allocation9], 1
    %s510 = scalar_lea.sflag [#allocation9], 1
    %511 = vsyncpa %s510, 1

</llo_original>
